<compile_context>
chip_gen: v7x
topology: tpu7x:2x2x1
jax: 0.10.0
libtpu: 0.0.40
codegen_flags: <defaults>
</compile_context>

<pallas_src>
import jax
import jax.numpy as jnp
from jax.experimental import pallas as pl
from jax.experimental.pallas import tpu as pltpu


# ---------------------------------------------------------------------------
# Glue: build the composite (subsample^n -> upsample-by-2^(n-1) -> upsample-to-size)
# interpolation matrices, matching PyTorch semantics exactly.
# ---------------------------------------------------------------------------
def _subsample_matrix(in_size: int, stride: int) -> jnp.ndarray:
    # AvgPool/MaxPool with kernel_size=1, stride=s  ==  x[..., ::s]
    out_size = (in_size - 1) // stride + 1
    rows = jnp.arange(out_size)
    cols = rows * stride
    m = jnp.zeros((out_size, in_size), dtype=jnp.float32)
    return m.at[rows, cols].set(1.0)


def _upsample_linear_matrix(in_size: int, out_size: int) -> jnp.ndarray:
    # 1-D linear interpolation matrix, align_corners=False (PyTorch default).
    scale = in_size / out_size
    dst = jnp.arange(out_size, dtype=jnp.float32)
    src = (dst + 0.5) * scale - 0.5
    src = jnp.maximum(src, 0.0)
    i0 = jnp.minimum(jnp.floor(src).astype(jnp.int32), in_size - 1)
    i1 = jnp.minimum(i0 + 1, in_size - 1)
    lam = src - i0.astype(jnp.float32)
    rows = jnp.arange(out_size)
    m = jnp.zeros((out_size, in_size), dtype=jnp.float32)
    m = m.at[rows, i0].add(1.0 - lam)
    m = m.at[rows, i1].add(lam)
    return m


def composite_matrix(size: int, n: int, stride: int = 2) -> jnp.ndarray:
    """(size, size) matrix implementing the full encoder->decoder chain along one axis."""
    m = jnp.eye(size, dtype=jnp.float32)
    cur = size
    for _ in range(n):                       # encoder: n subsamples (kernel_size=1 pooling)
        m = _subsample_matrix(cur, stride) @ m
        cur = (cur - 1) // stride + 1
    for _ in range(n - 1):                   # decoder: (n-1) scale_factor=2 upsamples
        nxt = cur * stride
        m = _upsample_linear_matrix(cur, nxt) @ m
        cur = nxt
    m = _upsample_linear_matrix(cur, size) @ m   # final Upsample(size=original)
    return m


# ---------------------------------------------------------------------------
# Tiling helper
# ---------------------------------------------------------------------------
def _choose_block_rows(batch: int, row_bytes: int,
                       target_block_bytes: int = 2 << 20) -> int:
    """Rows of the flattened batch per grid step."""
    tb = max(1, target_block_bytes // max(row_bytes, 1))
    tb = min(tb, batch)
    # Keep the grid at least 2 steps long for large batches (v7x megacore: 2 TCs).
    if batch >= 16 and tb == batch:
        tb = -(-batch // 2)
    if tb >= 8:
        tb = -(-tb // 8) * 8          # round up to a sublane multiple
    return int(tb)


_VMEM_LIMIT = 32 * 1024 * 1024         # safe on v5e/v6e (128 MiB) and v7x (64 MiB phys)
_KRON_BYTES_BUDGET = 8 << 20           # keep kron(A_h, A_w) comfortably VMEM-resident


# ---------------------------------------------------------------------------
# Primary kernel: one lane-dense, large-M matmul per block:  (TB, HW) @ (HW, HW)
# ---------------------------------------------------------------------------
def _kron_kernel(x_ref, kt_ref, o_ref):
    o_ref[...] = jnp.dot(
        x_ref[...], kt_ref[...], preferred_element_type=jnp.float32
    ).astype(o_ref.dtype)


def _forward_kron(xb, kt, out_dtype, compute_dtype):
    B, HW = xb.shape
    csize = jnp.dtype(compute_dtype).itemsize
    tb = _choose_block_rows(B, HW * csize)
    Bp = pl.cdiv(B, tb) * tb

    xp = xb.astype(compute_dtype)
    if Bp != B:
        xp = jnp.pad(xp, ((0, Bp - B), (0, 0)))
    ktc = kt.astype(compute_dtype)

    cost = pl.CostEstimate(
        flops=2 * Bp * HW * HW,
        transcendentals=0,
        bytes_accessed=(2 * Bp * HW + HW * HW) * csize,
    )
    out = pl.pallas_call(
        _kron_kernel,
        out_shape=jax.ShapeDtypeStruct((Bp, HW), out_dtype),
        grid_spec=pltpu.PrefetchScalarGridSpec(
            num_scalar_prefetch=0,
            grid=(Bp // tb,),
            in_specs=[
                pl.BlockSpec((tb, HW), lambda b: (b, 0)),
                pl.BlockSpec((HW, HW), lambda b: (0, 0)),   # resident weights
            ],
            out_specs=pl.BlockSpec((tb, HW), lambda b: (b, 0)),
        ),
        compiler_params=pltpu.CompilerParams(
            dimension_semantics=("parallel",),
            vmem_limit_bytes=_VMEM_LIMIT,
        ),
        cost_estimate=cost,
    )(xp, ktc)
    return out[:B] if Bp != B else out


# ---------------------------------------------------------------------------
# Fallback kernel for large H*W: separable big-M matmuls on (TB, H, W) blocks.
# ---------------------------------------------------------------------------
def _separable_kernel(x_ref, aw_t_ref, ah_t_ref, o_ref):
    tb, h, w = x_ref.shape
    # W contraction: (TB*H, W) @ (W, W)   -- large M
    t = jnp.dot(x_ref[...].reshape(tb * h, w), aw_t_ref[...],
                preferred_element_type=jnp.float32)
    # H contraction: swap minor dims, (TB*W, H) @ (H, H)   -- large M
    t = jnp.swapaxes(t.reshape(tb, h, w), 1, 2).reshape(tb * w, h)
    u = jnp.dot(t, ah_t_ref[...], preferred_element_type=jnp.float32)
    o_ref[...] = jnp.swapaxes(u.reshape(tb, w, h), 1, 2).astype(o_ref.dtype)


def _forward_separable(xb, a_h, a_w, out_dtype, compute_dtype):
    B, H, W = xb.shape
    csize = jnp.dtype(compute_dtype).itemsize
    tb = _choose_block_rows(B, H * W * csize)
    Bp = pl.cdiv(B, tb) * tb

    xp = xb.astype(compute_dtype)
    if Bp != B:
        xp = jnp.pad(xp, ((0, Bp - B), (0, 0), (0, 0)))
    aw_t = a_w.T.astype(compute_dtype)   # transposes hoisted out of the kernel
    ah_t = a_h.T.astype(compute_dtype)

    cost = pl.CostEstimate(
        flops=2 * Bp * H * W * (H + W),
        transcendentals=0,
        bytes_accessed=(2 * Bp * H * W + H * H + W * W) * csize,
    )
    out = pl.pallas_call(
        _separable_kernel,
        out_shape=jax.ShapeDtypeStruct((Bp, H, W), out_dtype),
        grid_spec=pltpu.PrefetchScalarGridSpec(
            num_scalar_prefetch=0,
            grid=(Bp // tb,),
            in_specs=[
                pl.BlockSpec((tb, H, W), lambda b: (b, 0, 0)),
                pl.BlockSpec((W, W), lambda b: (0, 0)),
                pl.BlockSpec((H, H), lambda b: (0, 0)),
            ],
            out_specs=pl.BlockSpec((tb, H, W), lambda b: (b, 0, 0)),
        ),
        compiler_params=pltpu.CompilerParams(
            dimension_semantics=("parallel",),
            vmem_limit_bytes=_VMEM_LIMIT,
        ),
        cost_estimate=cost,
    )(xp, aw_t, ah_t)
    return out[:B] if Bp != B else out


# ---------------------------------------------------------------------------
# Public wrapper
# ---------------------------------------------------------------------------
def noconv_ae_forward(x: jnp.ndarray, n: int = 2,
                      compute_dtype=jnp.float32) -> jnp.ndarray:
    """x: (N, D, H, W) -> (N, D, H, W).  NoConvAE(n, 'spatial', 'Avg') forward.

    compute_dtype=jnp.bfloat16 is recommended on v6e/v7x (f32 accumulation is kept);
    default float32 preserves the 1e-4 reference tolerance.
    """
    N, D, H, W = x.shape
    A_h = composite_matrix(H, n)
    A_w = composite_matrix(W, n)
    B = N * D
    csize = jnp.dtype(compute_dtype).itemsize

    if (H * W) * (H * W) * csize <= _KRON_BYTES_BUDGET:
        # vec_row(A_h @ X @ A_w^T) = vec_row(X) @ kron(A_h, A_w)^T
        kt = jnp.kron(A_h, A_w).T
        out = _forward_kron(x.reshape(B, H * W), kt, x.dtype, compute_dtype)
    else:
        # TODO(synk): for very large H/W the dense composite matrices are banded
        # (bandwidth ~2^n); a banded/blocked A would cut the O(H^2 W + H W^2) FLOPs.
        out = _forward_separable(x.reshape(B, H, W), A_h, A_w, x.dtype, compute_dtype)
    return out.reshape(N, D, H, W)


if __name__ == "__main__":
    # NoConvAE has no learnable parameters; the only "weights" are the deterministic
    # interpolation matrices derived above.
    n = 2
    key = jax.random.PRNGKey(0)
    x = jax.random.normal(key, (2, 4, 16, 16), dtype=jnp.float32)  # (N, D, H, W)

    out = jax.block_until_ready(noconv_ae_forward(x, n=n))
    assert out.shape == x.shape and out.dtype == x.dtype

    # Pure-JAX reference of the separable formulation (checks the Pallas plumbing and
    # the kron folding).
    A_h = composite_matrix(x.shape[2], n)
    A_w = composite_matrix(x.shape[3], n)
    ref = jnp.einsum("ih,ndhw,jw->ndij", A_h, x, A_w)
    assert jnp.allclose(out, ref, atol=1e-4, rtol=1e-4)

    print("KERNEL_OK")
</pallas_src>

<mosaic_0001>
module attributes {stable_mosaic.version = 11 : i64} {
  func.func @_kron_kernel(%arg0: i32, %arg1: memref<8x256xf32, #tpu.memory_space<vmem>>, %arg2: memref<256x256xf32, #tpu.memory_space<vmem>>, %arg3: memref<8x256xf32, #tpu.memory_space<vmem>>) attributes {dimension_semantics = [#tpu.dimension_semantics<parallel>], iteration_bounds = array<i64: 1>, scalar_prefetch = 0 : i64, scratch_operands = 0 : i64, tpu.core_type = #tpu.core_type<tc>, window_params = [{transform_indices = @transform_0, window_bounds = array<i64: 8, 256>}, {pipeline_mode = #tpu.pipeline_mode<synchronous>, transform_indices = @transform_1, window_bounds = array<i64: 256, 256>}, {transform_indices = @transform_2, window_bounds = array<i64: 8, 256>}]} {
    %c0 = arith.constant 0 : index
    %c0_0 = arith.constant 0 : index
    %0 = vector.load %arg1[%c0, %c0_0] : memref<8x256xf32, #tpu.memory_space<vmem>>, vector<8x256xf32>
    %c0_1 = arith.constant 0 : index
    %c0_2 = arith.constant 0 : index
    %1 = vector.load %arg2[%c0_1, %c0_2] : memref<256x256xf32, #tpu.memory_space<vmem>>, vector<256x256xf32>
    %cst = arith.constant dense<0.000000e+00> : vector<8x256xf32>
    %2 = tpu.matmul %0, %1, %cst {dimension_numbers = #tpu.dot_dimension_numbers<[1], [0], [0], [1], [0, 0, 1, 1], [], []>} : vector<8x256xf32>, vector<256x256xf32>, vector<8x256xf32> -> vector<8x256xf32>
    %c0_3 = arith.constant 0 : index
    %c0_4 = arith.constant 0 : index
    %3 = vector.load %arg3[%c0_3, %c0_4] : memref<8x256xf32, #tpu.memory_space<vmem>>, vector<8x256xf32>
    tpu.vector_store %arg3[%c0_3, %c0_4], %2 {strides = array<i32>} : memref<8x256xf32, #tpu.memory_space<vmem>>, vector<8x256xf32>,
    return
  }
  func.func @transform_0(%arg0: i32) -> (i32, i32) {
    %c0_i32 = arith.constant 0 : i32
    %c0_i32_0 = arith.constant 0 : i32
    return %arg0, %c0_i32 : i32, i32
  }
  func.func @transform_1(%arg0: i32) -> (i32, i32) {
    %c0_i32 = arith.constant 0 : i32
    %c0_i32_0 = arith.constant 0 : i32
    %c0_i32_1 = arith.constant 0 : i32
    return %c0_i32, %c0_i32_0 : i32, i32
  }
  func.func @transform_2(%arg0: i32) -> (i32, i32) {
    %c0_i32 = arith.constant 0 : i32
    %c0_i32_0 = arith.constant 0 : i32
    return %arg0, %c0_i32 : i32, i32
  }
}

</mosaic_0001>

<llo_original>
// kernel: tpu_custom_call.1
$region0: #{tpu_custom_call.1}
  #allocation0 [shape = 'u32[]', space=smem, size = 0x4, offset = 0x4, fixed_abs, tag = 'smem constant byte address 0x4 - core index']
  #allocation1 [shape = 'u32[144,128]{1,0:T(1,128)}', space=vmem, size = 0x12000, scoped, tag = 'internal scratch']
  %s0 = inlined_call_operand.hbm [shape: f32[8,256], index: 0, kind: input, shape index: {}]
  %s1 = inlined_call_operand.hbm [shape: f32[256,256], index: 1, kind: input, shape index: {}]
  %s2 = inlined_call_operand.hbm [shape: f32[8,256], index: 2, kind: output, shape index: {}]
  %s3 = sld [smem:[#allocation0]]
  $region26: #{tpu_custom_call.1} parent=0
    _
  %s5 = ssub.s32 1, %s3
  %s6 = scalar_select 0, %s5, %s3
  $region1: #{tpu_custom_call.1} parent=0
    #allocation2 [shape = 'u8[8192]{0}', space=vmem, size = 0x2000, scoped, tag = 'input window, operand 0, single buffered']
    #allocation3 [shape = 's32[1]{0}', space=sflag, size = 0x4, scoped, tag = 'scoped memory for tpu_custom_call.1']
    #allocation4 [shape = 's32[1]{0}', space=sflag, size = 0x4, scoped, tag = 'scoped memory for tpu_custom_call.1']
    #allocation5 [shape = 'u8[262144]{0}', space=vmem, size = 0x40000, scoped, tag = 'input window, operand 1, single buffered']
    #allocation6 [shape = 's32[1]{0}', space=sflag, size = 0x4, scoped, tag = 'scoped memory for tpu_custom_call.1']
    #allocation7 [shape = 'u8[8192]{0}', space=vmem, size = 0x2000, scoped, tag = 'output window, operand 0, single buffered']
    %7 = vsyncpa [#allocation3], 0
    %8 = vsyncpa [#allocation6], 0
    %9 = vsyncpa [#allocation4], 0
    // Predicated region
    $region2: #{tpu_custom_call.1} parent=1 // pred_check
      _
    $region3: #{tpu_custom_call.1} parent=1 // pred_check_branch
      %11 = sbr.rel (0) target = $region5
    $region4: #{tpu_custom_call.1} parent=1 // pred_region
      %s13 = ssub.s32 256, 256
      %14 = vsyncadd [#allocation3], %s13
      %s16 = sshll.u32 [#allocation2], 4
      %s17 = int_to_ptr.vmem [resolvable:$true] %s16
      %19 = dma.hbm_to_vmem [thread:$0]  %s0, 256, %s17, [#allocation3]
    $region5: #{tpu_custom_call.1} parent=1 // pred_fallthru
      _
    // Predicated region
    $region6: #{tpu_custom_call.1} parent=1 // pred_check
      _
    $region7: #{tpu_custom_call.1} parent=1 // pred_check_branch
      %21 = sbr.rel (0) target = $region9
    $region8: #{tpu_custom_call.1} parent=1 // pred_region
      %s23 = ssub.s32 8192, 8192
      %24 = vsyncadd [#allocation6], %s23
      %s25 = sshll.u32 [#allocation5], 4
      %s26 = int_to_ptr.vmem [resolvable:$true] %s25
      %31 = dma.hbm_to_vmem [thread:$0]  %s1, 8192, %s26, [#allocation6], 256, 256, 16
    $region9: #{tpu_custom_call.1} parent=1 // pred_fallthru
      _
    // Predicated region
    $region10: #{tpu_custom_call.1} parent=1 // pred_check
      _
    $region11: #{tpu_custom_call.1} parent=1 // pred_check_branch
      %33 = sbr.rel (0) target = $region13
    $region12: #{tpu_custom_call.1} parent=1 // pred_region
      %34 = dma.done [#allocation3], 256
    $region13: #{tpu_custom_call.1} parent=1 // pred_fallthru
      _
    // Predicated region
    $region14: #{tpu_custom_call.1} parent=1 // pred_check
      _
    $region15: #{tpu_custom_call.1} parent=1 // pred_check_branch
      %36 = sbr.rel (0) target = $region17
    $region16: #{tpu_custom_call.1} parent=1 // pred_region
      %37 = dma.done [#allocation6], 8192
    $region17: #{tpu_custom_call.1} parent=1 // pred_fallthru
      _
    %v38 = vld [vmem:[#allocation2] sm:$0xff]
    %v39 = vld [vmem:[#allocation2 + $0x8] sm:$0xff]
    %v40 = vld [vmem:[#allocation5] sm:$0xff]
    %v41 = vld [vmem:[#allocation5 + $0x8] sm:$0xff]
    %v42 = vld [vmem:[#allocation5 + $0x10] sm:$0xff]
    %v43 = vld [vmem:[#allocation5 + $0x18] sm:$0xff]
    %v44 = vld [vmem:[#allocation5 + $0x20] sm:$0xff]
    %v45 = vld [vmem:[#allocation5 + $0x28] sm:$0xff]
    %v46 = vld [vmem:[#allocation5 + $0x30] sm:$0xff]
    %v47 = vld [vmem:[#allocation5 + $0x38] sm:$0xff]
    %v48 = vld [vmem:[#allocation5 + $0x40] sm:$0xff]
    %v49 = vld [vmem:[#allocation5 + $0x48] sm:$0xff]
    %v50 = vld [vmem:[#allocation5 + $0x50] sm:$0xff]
    %v51 = vld [vmem:[#allocation5 + $0x58] sm:$0xff]
    %v52 = vld [vmem:[#allocation5 + $0x60] sm:$0xff]
    %v53 = vld [vmem:[#allocation5 + $0x68] sm:$0xff]
    %v54 = vld [vmem:[#allocation5 + $0x70] sm:$0xff]
    %v55 = vld [vmem:[#allocation5 + $0x78] sm:$0xff]
    %v56 = vld [vmem:[#allocation5 + $0x80] sm:$0xff]
    %v57 = vld [vmem:[#allocation5 + $0x88] sm:$0xff]
    %v58 = vld [vmem:[#allocation5 + $0x90] sm:$0xff]
    %v59 = vld [vmem:[#allocation5 + $0x98] sm:$0xff]
    %v60 = vld [vmem:[#allocation5 + $0xa0] sm:$0xff]
    %v61 = vld [vmem:[#allocation5 + $0xa8] sm:$0xff]
    %v62 = vld [vmem:[#allocation5 + $0xb0] sm:$0xff]
    %v63 = vld [vmem:[#allocation5 + $0xb8] sm:$0xff]
    %v64 = vld [vmem:[#allocation5 + $0xc0] sm:$0xff]
    %v65 = vld [vmem:[#allocation5 + $0xc8] sm:$0xff]
    %v66 = vld [vmem:[#allocation5 + $0xd0] sm:$0xff]
    %v67 = vld [vmem:[#allocation5 + $0xd8] sm:$0xff]
    %v68 = vld [vmem:[#allocation5 + $0xe0] sm:$0xff]
    %v69 = vld [vmem:[#allocation5 + $0xe8] sm:$0xff]
    %v70 = vld [vmem:[#allocation5 + $0xf0] sm:$0xff]
    %v71 = vld [vmem:[#allocation5 + $0xf8] sm:$0xff]
    %v72 = vld [vmem:[#allocation5 + $0x100] sm:$0xff]
    %v73 = vld [vmem:[#allocation5 + $0x108] sm:$0xff]
    %v74 = vld [vmem:[#allocation5 + $0x110] sm:$0xff]
    %v75 = vld [vmem:[#allocation5 + $0x118] sm:$0xff]
    %v76 = vld [vmem:[#allocation5 + $0x120] sm:$0xff]
    %v77 = vld [vmem:[#allocation5 + $0x128] sm:$0xff]
    %v78 = vld [vmem:[#allocation5 + $0x130] sm:$0xff]
    %v79 = vld [vmem:[#allocation5 + $0x138] sm:$0xff]
    %v80 = vld [vmem:[#allocation5 + $0x140] sm:$0xff]
    %v81 = vld [vmem:[#allocation5 + $0x148] sm:$0xff]
    %v82 = vld [vmem:[#allocation5 + $0x150] sm:$0xff]
    %v83 = vld [vmem:[#allocation5 + $0x158] sm:$0xff]
    %v84 = vld [vmem:[#allocation5 + $0x160] sm:$0xff]
    %v85 = vld [vmem:[#allocation5 + $0x168] sm:$0xff]
    %v86 = vld [vmem:[#allocation5 + $0x170] sm:$0xff]
    %v87 = vld [vmem:[#allocation5 + $0x178] sm:$0xff]
    %v88 = vld [vmem:[#allocation5 + $0x180] sm:$0xff]
    %v89 = vld [vmem:[#allocation5 + $0x188] sm:$0xff]
    %v90 = vld [vmem:[#allocation5 + $0x190] sm:$0xff]
    %v91 = vld [vmem:[#allocation5 + $0x198] sm:$0xff]
    %v92 = vld [vmem:[#allocation5 + $0x1a0] sm:$0xff]
    %v93 = vld [vmem:[#allocation5 + $0x1a8] sm:$0xff]
    %v94 = vld [vmem:[#allocation5 + $0x1b0] sm:$0xff]
    %v95 = vld [vmem:[#allocation5 + $0x1b8] sm:$0xff]
    %v96 = vld [vmem:[#allocation5 + $0x1c0] sm:$0xff]
    %v97 = vld [vmem:[#allocation5 + $0x1c8] sm:$0xff]
    %v98 = vld [vmem:[#allocation5 + $0x1d0] sm:$0xff]
    %v99 = vld [vmem:[#allocation5 + $0x1d8] sm:$0xff]
    %v100 = vld [vmem:[#allocation5 + $0x1e0] sm:$0xff]
    %v101 = vld [vmem:[#allocation5 + $0x1e8] sm:$0xff]
    %v102 = vld [vmem:[#allocation5 + $0x1f0] sm:$0xff]
    %v103 = vld [vmem:[#allocation5 + $0x1f8] sm:$0xff]
    %104 = vmatprep.subr.mxu0 %v41
    %105 = vmatpush1.msra.mxu0 %v40
    %106 = vmatprep.subr.mxu0 %v43
    %107 = vmatpush1.msra.mxu0 %v42
    %108 = vmatprep.subr.mxu0 %v45
    %109 = vmatpush1.msra.mxu0 %v44
    %110 = vmatprep.subr.mxu0 %v47
    %111 = vmatpush1.msra.mxu0 %v46
    %112 = vmatprep.subr.mxu0 %v49
    %113 = vmatpush1.msra.mxu0 %v48
    %114 = vmatprep.subr.mxu0 %v51
    %115 = vmatpush1.msra.mxu0 %v50
    %116 = vmatprep.subr.mxu0 %v53
    %117 = vmatpush1.msra.mxu0 %v52
    %118 = vmatprep.subr.mxu0 %v55
    %119 = vmatpush1.msra.mxu0 %v54
    %120 = vmatprep.subr.mxu0 %v57
    %121 = vmatpush1.msra.mxu0 %v56
    %122 = vmatprep.subr.mxu0 %v59
    %123 = vmatpush1.msra.mxu0 %v58
    %124 = vmatprep.subr.mxu0 %v61
    %125 = vmatpush1.msra.mxu0 %v60
    %126 = vmatprep.subr.mxu0 %v63
    %127 = vmatpush1.msra.mxu0 %v62
    %128 = vmatprep.subr.mxu0 %v65
    %129 = vmatpush1.msra.mxu0 %v64
    %130 = vmatprep.subr.mxu0 %v67
    %131 = vmatpush1.msra.mxu0 %v66
    %132 = vmatprep.subr.mxu0 %v69
    %133 = vmatpush1.msra.mxu0 %v68
    %134 = vmatprep.subr.mxu0 %v71
    %135 = vmatpush1.msra.mxu0 %v70
    %136 = vmatprep.subr.mxu0 %v73
    %137 = vmatpush1.msra.mxu0 %v72
    %138 = vmatprep.subr.mxu0 %v75
    %139 = vmatpush1.msra.mxu0 %v74
    %140 = vmatprep.subr.mxu0 %v77
    %141 = vmatpush1.msra.mxu0 %v76
    %142 = vmatprep.subr.mxu0 %v79
    %143 = vmatpush1.msra.mxu0 %v78
    %144 = vmatprep.subr.mxu0 %v81
    %145 = vmatpush1.msra.mxu0 %v80
    %146 = vmatprep.subr.mxu0 %v83
    %147 = vmatpush1.msra.mxu0 %v82
    %148 = vmatprep.subr.mxu0 %v85
    %149 = vmatpush1.msra.mxu0 %v84
    %150 = vmatprep.subr.mxu0 %v87
    %151 = vmatpush1.msra.mxu0 %v86
    %152 = vmatprep.subr.mxu0 %v89
    %153 = vmatpush1.msra.mxu0 %v88
    %154 = vmatprep.subr.mxu0 %v91
    %155 = vmatpush1.msra.mxu0 %v90
    %156 = vmatprep.subr.mxu0 %v93
    %157 = vmatpush1.msra.mxu0 %v92
    %158 = vmatprep.subr.mxu0 %v95
    %159 = vmatpush1.msra.mxu0 %v94
    %160 = vmatprep.subr.mxu0 %v97
    %161 = vmatpush1.msra.mxu0 %v96
    %162 = vmatprep.subr.mxu0 %v99
    %163 = vmatpush1.msra.mxu0 %v98
    %164 = vmatprep.subr.mxu0 %v101
    %165 = vmatpush1.msra.mxu0 %v100
    %166 = vmatprep.subr.mxu0 %v103
    %167 = vmatpush1.msra.mxu0 %v102
    %168 = vmatprep.mubr.f32.mxu0 %v39
    %169 = vmatmul.mubr.f32.gmra.mrb[0].mxu0 %v38
    %v170 = vpop.f32.mrb[0].mxu0
    %v171 = vadd.f32 0.0, %v170
    %v172 = vpop.f32.mrb[0].mxu0
    %v173 = vadd.f32 0.0, %v172
    %174 = vdwg.mxu0
    %175 = vst [vmem:[#allocation7] sm:$0xff] %v171
    %176 = vst [vmem:[#allocation7 + $0x8] sm:$0xff] %v173
    // Predicated region
    $region18: #{tpu_custom_call.1} parent=1 // pred_check
      _
    $region19: #{tpu_custom_call.1} parent=1 // pred_check_branch
      %178 = sbr.rel (0) target = $region21
    $region20: #{tpu_custom_call.1} parent=1 // pred_region
      %s180 = ssub.s32 256, 256
      %181 = vsyncadd [#allocation4], %s180
      %s183 = sshll.u32 [#allocation7], 4
      %s184 = int_to_ptr.vmem [resolvable:$true] %s183
      %186 = dma.vmem_to_hbm [thread:$0]  %s184, 256, %s2, [#allocation4]
    $region21: #{tpu_custom_call.1} parent=1 // pred_fallthru
      _
    // Predicated region
    $region22: #{tpu_custom_call.1} parent=1 // pred_check
      _
    $region23: #{tpu_custom_call.1} parent=1 // pred_check_branch
      %188 = sbr.rel (0) target = $region25
    $region24: #{tpu_custom_call.1} parent=1 // pred_region
      %189 = dma.done [#allocation4], 256
    $region25: #{tpu_custom_call.1} parent=1 // pred_fallthru
      _
    %190 = vsyncpa [#allocation3], 1
    %191 = vsyncpa [#allocation6], 1
    %192 = vsyncpa [#allocation4], 1

</llo_original>
